<compile_context>
chip_gen: v7x
topology: tpu7x:2x2x1
jax: 0.10.0
libtpu: 0.0.40
codegen_flags: <defaults>
</compile_context>

<pallas_src>
import functools

import jax
import jax.numpy as jnp
from jax.experimental import pallas as pl
from jax.experimental.pallas import tpu as pltpu


_MAX_GROUP_UNROLL = 16  # bound the static unroll over groups (vreg live ranges)


def _vmem_capacity_bytes():
    try:
        return int(pltpu.get_tpu_info().vmem_capacity_bytes)
    except Exception:
        return 64 * 1024 * 1024  # conservative: v7x has 64 MiB per TensorCore


def _plan(B, F, in_dim, h1, h2, out_dim):
    """Pick (feature_chunk, block-diag group, batch tile, vmem_limit_bytes)."""
    vmem_cap = _vmem_capacity_bytes()
    budget = vmem_cap // 4  # per-step working-set target (~half the scoped limit)

    # ---- batch tile: full batch if small, else a 256-512 row tile ----------
    b_blk = B
    if B > 512 and B % 8 == 0:
        for cand in (512, 384, 256, 128, 64, 32, 16, 8):
            if B % cand == 0:
                b_blk = cand
                break

    # ---- block-diag group size: fill MXU K/N lanes without inflating the
    #      g x redundant MACs of the block-diagonal matmul too far ----------
    def pick_g(fb):
        if in_dim % 16 or h1 % 16 or h2 % 16:  # keep bf16 sublane-aligned scatter
            return 1
        g = 1
        while (fb % (2 * g) == 0) and (2 * g * max(in_dim, h1, h2) <= 256):
            g *= 2
        return g

    # ---- per-step VMEM estimate (double-buffered blocks + scratch) ---------
    def step_bytes(fb, g):
        w = fb * (in_dim * h1 + h1 * h2 + h2 * out_dim) * 2
        vec = fb * (2 * h1 + 2 * h2 + out_dim) * 4
        xb = b_blk * fb * in_dim * 2
        ob = b_blk * fb * out_dim * 4
        bd = (g * in_dim * g * h1 + g * h1 * g * h2 + g * h2 * g * out_dim) * 2
        act = 2 * b_blk * g * (h1 + h2) * 4
        return 2 * (w + vec + xb + ob) + bd + act

    # ---- feature chunk: largest (8,128)-legal divisor of F inside budget ---
    dims = (in_dim, h1, h2, out_dim)
    legal = [fb for fb in range(1, F + 1)
             if F % fb == 0
             and (fb == F or all((fb * d) % 128 == 0 for d in dims))]
    f_blk = min(legal)  # correctness fallback (always exists: fb == F is legal)
    for fb in sorted(legal):
        g = pick_g(fb)
        if fb // g <= _MAX_GROUP_UNROLL and step_bytes(fb, g) <= budget:
            f_blk = fb
    g = pick_g(f_blk)

    vmem_limit = int(min(vmem_cap * 3 // 4,
                         max(32 * 1024 * 1024, 3 * step_bytes(f_blk, g))))
    return f_blk, g, b_blk, vmem_limit


def _cell_chunk_kernel(x_ref, w1_ref, v1_ref, w2_ref, v2_ref, w3_ref, b3_ref,
                       o_ref, bd1_ref, bd2_ref, bd3_ref, *, g):
    """One grid step = one (feature chunk, batch tile).

    x_ref : (Bblk, f_blk*in_dim) bf16       lane-dense per-feature concat
    w*_ref: (f_blk, fan_in, fan_out) bf16   packed per-feature weights
    v1_ref: (2, f_blk*h1) f32               rows = [BN1 scale, BN1 shift(+bias)]
    v2_ref: (2, f_blk*h2) f32               rows = [BN2 scale, BN2 shift(+bias)]
    b3_ref: (1, f_blk*out_dim) f32
    o_ref : (Bblk, f_blk*out_dim) f32       lane-dense concat-layout output
    bd*   : (g*fan_in, g*fan_out) bf16      block-diagonal VMEM scratch
    """
    f_blk, in_dim, h1 = w1_ref.shape
    h2 = w2_ref.shape[2]
    out_dim = w3_ref.shape[2]
    n_groups = f_blk // g

    if g > 1:
        # Off-diagonal zeros are written once per step; the per-group scatter
        # below only ever overwrites the diagonal blocks.
        bd1_ref[...] = jnp.zeros_like(bd1_ref)
        bd2_ref[...] = jnp.zeros_like(bd2_ref)
        bd3_ref[...] = jnp.zeros_like(bd3_ref)

    outs = []
    for gi in range(n_groups):
        if g > 1:
            # Build this group's block-diagonal weights in VMEM (weights stay
            # packed in HBM -> no g x HBM weight-traffic blow-up).
            for j in range(g):
                f = gi * g + j
                bd1_ref[j * in_dim:(j + 1) * in_dim, j * h1:(j + 1) * h1] = w1_ref[f]
                bd2_ref[j * h1:(j + 1) * h1, j * h2:(j + 1) * h2] = w2_ref[f]
                bd3_ref[j * h2:(j + 1) * h2, j * out_dim:(j + 1) * out_dim] = w3_ref[f]
            wa, wb, wc = bd1_ref[...], bd2_ref[...], bd3_ref[...]
        else:
            wa, wb, wc = w1_ref[gi], w2_ref[gi], w3_ref[gi]

        xg = x_ref[:, gi * g * in_dim:(gi + 1) * g * in_dim]      # (Bblk, g*in_dim)
        s1 = v1_ref[0:1, gi * g * h1:(gi + 1) * g * h1]
        t1 = v1_ref[1:2, gi * g * h1:(gi + 1) * g * h1]
        s2 = v2_ref[0:1, gi * g * h2:(gi + 1) * g * h2]
        t2 = v2_ref[1:2, gi * g * h2:(gi + 1) * g * h2]
        b3 = b3_ref[0:1, gi * g * out_dim:(gi + 1) * g * out_dim]

        # layer1: Linear -> BN(eval; bias folded into shift) -> ReLU -> Dropout(id)
        h = jnp.dot(xg, wa, preferred_element_type=jnp.float32)
        h = jnp.maximum(h * s1 + t1, 0.0)
        # layer2: Linear -> BN(eval) -> ReLU
        h = jnp.dot(h.astype(jnp.bfloat16), wb, preferred_element_type=jnp.float32)
        h = jnp.maximum(h * s2 + t2, 0.0)
        # layer3: Linear (+bias) -- result is already lane-dense in concat order
        outs.append(jnp.dot(h.astype(jnp.bfloat16), wc,
                            preferred_element_type=jnp.float32) + b3)

    # single lane-dense store of the whole (Bblk, f_blk*out_dim) output chunk
    y = outs[0] if n_groups == 1 else jnp.concatenate(outs, axis=-1)
    o_ref[...] = y.astype(o_ref.dtype)


def cell_forward(x, kp):
    """x: (B, F, in_dim) f32; kp from prepare_params(). Returns (B, F*out_dim) f32."""
    B, F, in_dim = x.shape
    w1, w2, w3 = kp["w1"], kp["w2"], kp["w3"]
    v1, v2, b3 = kp["v1"], kp["v2"], kp["b3"]
    h1, h2, out_dim = w1.shape[2], w2.shape[2], w3.shape[2]

    f_blk, g, b_blk, vmem_limit = _plan(B, F, in_dim, h1, h2, out_dim)
    grid = (F // f_blk, B // b_blk)     # feature chunks outer, batch tiles inner

    # lane-dense bf16 input: (B,F,in) -> (B, F*in) is a free contiguous reshape;
    # the cast halves x HBM bytes and removes per-feature in-kernel casts.
    x_flat = x.reshape(B, F * in_dim).astype(jnp.bfloat16)

    kernel = functools.partial(_cell_chunk_kernel, g=g)

    return pl.pallas_call(
        kernel,
        out_shape=jax.ShapeDtypeStruct((B, F * out_dim), jnp.float32),
        grid_spec=pltpu.PrefetchScalarGridSpec(
            num_scalar_prefetch=0,
            grid=grid,
            in_specs=[
                pl.BlockSpec((b_blk, f_blk * in_dim), lambda i, b: (b, i)),
                # weight / BN index_maps ignore the batch axis -> each chunk's
                # parameters are DMA'd once and stay resident across batch tiles
                pl.BlockSpec((f_blk, in_dim, h1), lambda i, b: (i, 0, 0)),
                pl.BlockSpec((2, f_blk * h1), lambda i, b: (0, i)),
                pl.BlockSpec((f_blk, h1, h2), lambda i, b: (i, 0, 0)),
                pl.BlockSpec((2, f_blk * h2), lambda i, b: (0, i)),
                pl.BlockSpec((f_blk, h2, out_dim), lambda i, b: (i, 0, 0)),
                pl.BlockSpec((1, f_blk * out_dim), lambda i, b: (0, i)),
            ],
            out_specs=pl.BlockSpec((b_blk, f_blk * out_dim), lambda i, b: (b, i)),
            scratch_shapes=[
                pltpu.VMEM((g * in_dim, g * h1), jnp.bfloat16),
                pltpu.VMEM((g * h1, g * h2), jnp.bfloat16),
                pltpu.VMEM((g * h2, g * out_dim), jnp.bfloat16),
            ],
        ),
        compiler_params=pltpu.CompilerParams(
            dimension_semantics=("parallel", "parallel"),
            vmem_limit_bytes=vmem_limit),
    )(x_flat, w1, v1, w2, v2, w3, b3)


def prepare_params(p, matmul_dtype=jnp.bfloat16):
    """Kernel-ready parameter glue (one-time, outside the hot path).

    Folds each Linear bias into the eval-mode BN shift:
        (x @ W + b) * s + t  ==  (x @ W) * s + (t + b * s),
    casts matmul weights to bf16 (f32 accumulation in-kernel), and packs the
    per-feature BN vectors lane-dense (same feature-major order as x / output).
    """
    F, _, h1 = p["w1"].shape
    h2 = p["w2"].shape[2]
    out_dim = p["w3"].shape[2]
    t1 = p["t1"] + p["b1"] * p["s1"]
    t2 = p["t2"] + p["b2"] * p["s2"]

    def pack2(scale, shift, dim):
        return jnp.stack([scale.reshape(F * dim), shift.reshape(F * dim)], axis=0)

    return dict(
        w1=p["w1"].astype(matmul_dtype),
        w2=p["w2"].astype(matmul_dtype),
        w3=p["w3"].astype(matmul_dtype),
        v1=pack2(p["s1"], t1, h1),
        v2=pack2(p["s2"], t2, h2),
        b3=p["b3"].reshape(1, F * out_dim),
    )


def init_params(key, in_dim, n_hidden_1, n_hidden_2, out_dim, num_features,
                eps=1e-5):
    """Deterministic synthetic parameters for the stacked Dense blocks (f32).

    Linear weights are stored pre-transposed as (F, fan_in, fan_out); biases
    and BN params as (F, 1, fan_out).  Eval-mode BatchNorm1d is folded into
    (scale, shift): scale = gamma / sqrt(running_var + eps),
                    shift = beta - running_mean * scale.
    """
    F = num_features
    ks = jax.random.split(key, 12)

    def lin(kw, kb, fan_in, fan_out):
        bound = 1.0 / jnp.sqrt(fan_in)
        w = jax.random.uniform(kw, (F, fan_in, fan_out), jnp.float32, -bound, bound)
        b = jax.random.uniform(kb, (F, 1, fan_out), jnp.float32, -bound, bound)
        return w, b

    def bn(kg, kb, km, kv, dim):
        gamma = 1.0 + 0.1 * jax.random.normal(kg, (F, 1, dim), jnp.float32)
        beta = 0.1 * jax.random.normal(kb, (F, 1, dim), jnp.float32)
        rmean = 0.1 * jax.random.normal(km, (F, 1, dim), jnp.float32)
        rvar = 1.0 + 0.1 * jax.random.uniform(kv, (F, 1, dim), jnp.float32)
        scale = gamma * jax.lax.rsqrt(rvar + eps)
        shift = beta - rmean * scale
        return scale, shift

    w1, b1 = lin(ks[0], ks[1], in_dim, n_hidden_1)
    s1, t1 = bn(ks[2], ks[3], ks[4], ks[5], n_hidden_1)
    w2, b2 = lin(ks[6], ks[7], n_hidden_1, n_hidden_2)
    s2, t2 = bn(ks[8], ks[9], ks[10], ks[11], n_hidden_2)
    kw3, kb3 = jax.random.split(jax.random.fold_in(key, 99))
    w3, b3 = lin(kw3, kb3, n_hidden_2, out_dim)

    return dict(w1=w1, b1=b1, s1=s1, t1=t1,
                w2=w2, b2=b2, s2=s2, t2=t2,
                w3=w3, b3=b3)


def cell_reference(x, params):
    """Pure-JAX f32 reference for the same eval-mode forward."""
    B, F, _ = x.shape
    outs = []
    for i in range(F):
        h = x[:, i] @ params["w1"][i] + params["b1"][i]
        h = h * params["s1"][i] + params["t1"][i]
        h = jnp.maximum(h, 0.0)
        h = h @ params["w2"][i] + params["b2"][i]
        h = h * params["s2"][i] + params["t2"][i]
        h = jnp.maximum(h, 0.0)
        outs.append(h @ params["w3"][i] + params["b3"][i])
    return jnp.concatenate(outs, axis=1)


if __name__ == "__main__":
    B = 8
    num_features = 4
    in_dim, n_hidden_1, n_hidden_2, out_dim = 32, 64, 48, 16

    key = jax.random.PRNGKey(0)
    kx, kp = jax.random.split(key)
    x = jax.random.normal(kx, (B, num_features, in_dim), jnp.float32)
    raw_params = init_params(kp, in_dim, n_hidden_1, n_hidden_2, out_dim,
                             num_features)
    kparams = prepare_params(raw_params)

    cell_fn = jax.jit(cell_forward)
    y = jax.block_until_ready(cell_fn(x, kparams))
    y_ref = cell_reference(x, raw_params)

    assert y.shape == (B, num_features * out_dim), y.shape
    # bf16 MXU operands / activations (f32 accumulation) vs the f32 reference.
    err = float(jnp.max(jnp.abs(y - y_ref)))
    assert jnp.allclose(y, y_ref, atol=2e-2, rtol=2e-2), err
    print("KERNEL_OK")
</pallas_src>

<mosaic_0001>
module attributes {stable_mosaic.version = 11 : i64} {
  func.func @_cell_chunk_kernel(%arg0: i32, %arg1: i32, %arg2: memref<8x128xbf16, #tpu.memory_space<vmem>>, %arg3: memref<4x32x64xbf16, #tpu.memory_space<vmem>>, %arg4: memref<2x256xf32, #tpu.memory_space<vmem>>, %arg5: memref<4x64x48xbf16, #tpu.memory_space<vmem>>, %arg6: memref<2x192xf32, #tpu.memory_space<vmem>>, %arg7: memref<4x48x16xbf16, #tpu.memory_space<vmem>>, %arg8: memref<1x64xf32, #tpu.memory_space<vmem>>, %arg9: memref<8x64xf32, #tpu.memory_space<vmem>>, %arg10: memref<128x256xbf16, #tpu.memory_space<vmem>>, %arg11: memref<256x192xbf16, #tpu.memory_space<vmem>>, %arg12: memref<192x64xbf16, #tpu.memory_space<vmem>>) attributes {dimension_semantics = [#tpu.dimension_semantics<parallel>, #tpu.dimension_semantics<parallel>], iteration_bounds = array<i64: 1, 1>, scalar_prefetch = 0 : i64, scratch_operands = 3 : i64, tpu.core_type = #tpu.core_type<tc>, window_params = [{transform_indices = @transform_0, window_bounds = array<i64: 8, 128>}, {transform_indices = @transform_1, window_bounds = array<i64: 4, 32, 64>}, {transform_indices = @transform_2, window_bounds = array<i64: 2, 256>}, {transform_indices = @transform_3, window_bounds = array<i64: 4, 64, 48>}, {transform_indices = @transform_4, window_bounds = array<i64: 2, 192>}, {transform_indices = @transform_5, window_bounds = array<i64: 4, 48, 16>}, {transform_indices = @transform_6, window_bounds = array<i64: 1, 64>}, {transform_indices = @transform_7, window_bounds = array<i64: 8, 64>}]} {
    %cst = arith.constant 0.000000e+00 : bf16
    %0 = vector.broadcast %cst : bf16 to vector<128x256xbf16>
    %c0 = arith.constant 0 : index
    %c0_0 = arith.constant 0 : index
    %1 = vector.load %arg10[%c0, %c0_0] : memref<128x256xbf16, #tpu.memory_space<vmem>>, vector<128x256xbf16>
    tpu.vector_store %arg10[%c0, %c0_0], %0 {strides = array<i32>} : memref<128x256xbf16, #tpu.memory_space<vmem>>, vector<128x256xbf16>,
    %cst_1 = arith.constant 0.000000e+00 : bf16
    %2 = vector.broadcast %cst_1 : bf16 to vector<256x192xbf16>
    %c0_2 = arith.constant 0 : index
    %c0_3 = arith.constant 0 : index
    %3 = vector.load %arg11[%c0_2, %c0_3] : memref<256x192xbf16, #tpu.memory_space<vmem>>, vector<256x192xbf16>
    tpu.vector_store %arg11[%c0_2, %c0_3], %2 {strides = array<i32>} : memref<256x192xbf16, #tpu.memory_space<vmem>>, vector<256x192xbf16>,
    %cst_4 = arith.constant 0.000000e+00 : bf16
    %4 = vector.broadcast %cst_4 : bf16 to vector<192x64xbf16>
    %c0_5 = arith.constant 0 : index
    %c0_6 = arith.constant 0 : index
    %5 = vector.load %arg12[%c0_5, %c0_6] : memref<192x64xbf16, #tpu.memory_space<vmem>>, vector<192x64xbf16>
    tpu.vector_store %arg12[%c0_5, %c0_6], %4 {strides = array<i32>} : memref<192x64xbf16, #tpu.memory_space<vmem>>, vector<192x64xbf16>,
    %c0_7 = arith.constant 0 : index
    %c0_8 = arith.constant 0 : index
    %c0_9 = arith.constant 0 : index
    %6 = vector.load %arg3[%c0_7, %c0_8, %c0_9] : memref<4x32x64xbf16, #tpu.memory_space<vmem>>, vector<1x32x64xbf16>
    %7 = vector.shape_cast %6 : vector<1x32x64xbf16> to vector<32x64xbf16>
    %c0_10 = arith.constant 0 : index
    %c0_11 = arith.constant 0 : index
    %8 = vector.load %arg10[%c0_10, %c0_11] : memref<128x256xbf16, #tpu.memory_space<vmem>>, vector<32x64xbf16>
    tpu.vector_store %arg10[%c0_10, %c0_11], %7 {strides = array<i32>} : memref<128x256xbf16, #tpu.memory_space<vmem>>, vector<32x64xbf16>,
    %c0_12 = arith.constant 0 : index
    %c0_13 = arith.constant 0 : index
    %c0_14 = arith.constant 0 : index
    %9 = vector.load %arg5[%c0_12, %c0_13, %c0_14] : memref<4x64x48xbf16, #tpu.memory_space<vmem>>, vector<1x64x48xbf16>
    %10 = vector.shape_cast %9 : vector<1x64x48xbf16> to vector<64x48xbf16>
    %c0_15 = arith.constant 0 : index
    %c0_16 = arith.constant 0 : index
    %11 = vector.load %arg11[%c0_15, %c0_16] : memref<256x192xbf16, #tpu.memory_space<vmem>>, vector<64x48xbf16>
    tpu.vector_store %arg11[%c0_15, %c0_16], %10 {strides = array<i32>} : memref<256x192xbf16, #tpu.memory_space<vmem>>, vector<64x48xbf16>,
    %c0_17 = arith.constant 0 : index
    %c0_18 = arith.constant 0 : index
    %c0_19 = arith.constant 0 : index
    %12 = vector.load %arg7[%c0_17, %c0_18, %c0_19] : memref<4x48x16xbf16, #tpu.memory_space<vmem>>, vector<1x48x16xbf16>
    %13 = vector.shape_cast %12 : vector<1x48x16xbf16> to vector<48x16xbf16>
    %c0_20 = arith.constant 0 : index
    %c0_21 = arith.constant 0 : index
    %14 = vector.load %arg12[%c0_20, %c0_21] : memref<192x64xbf16, #tpu.memory_space<vmem>>, vector<48x16xbf16>
    tpu.vector_store %arg12[%c0_20, %c0_21], %13 {strides = array<i32>} : memref<192x64xbf16, #tpu.memory_space<vmem>>, vector<48x16xbf16>,
    %c1 = arith.constant 1 : index
    %c0_22 = arith.constant 0 : index
    %c0_23 = arith.constant 0 : index
    %15 = vector.load %arg3[%c1, %c0_22, %c0_23] : memref<4x32x64xbf16, #tpu.memory_space<vmem>>, vector<1x32x64xbf16>
    %16 = vector.shape_cast %15 : vector<1x32x64xbf16> to vector<32x64xbf16>
    %c32 = arith.constant 32 : index
    %c64 = arith.constant 64 : index
    %17 = vector.load %arg10[%c32, %c64] : memref<128x256xbf16, #tpu.memory_space<vmem>>, vector<32x64xbf16>
    tpu.vector_store %arg10[%c32, %c64], %16 {strides = array<i32>} : memref<128x256xbf16, #tpu.memory_space<vmem>>, vector<32x64xbf16>,
    %c1_24 = arith.constant 1 : index
    %c0_25 = arith.constant 0 : index
    %c0_26 = arith.constant 0 : index
    %18 = vector.load %arg5[%c1_24, %c0_25, %c0_26] : memref<4x64x48xbf16, #tpu.memory_space<vmem>>, vector<1x64x48xbf16>
    %19 = vector.shape_cast %18 : vector<1x64x48xbf16> to vector<64x48xbf16>
    %c64_27 = arith.constant 64 : index
    %c48 = arith.constant 48 : index
    %20 = vector.load %arg11[%c64_27, %c48] : memref<256x192xbf16, #tpu.memory_space<vmem>>, vector<64x48xbf16>
    tpu.vector_store %arg11[%c64_27, %c48], %19 {strides = array<i32>} : memref<256x192xbf16, #tpu.memory_space<vmem>>, vector<64x48xbf16>,
    %c1_28 = arith.constant 1 : index
    %c0_29 = arith.constant 0 : index
    %c0_30 = arith.constant 0 : index
    %21 = vector.load %arg7[%c1_28, %c0_29, %c0_30] : memref<4x48x16xbf16, #tpu.memory_space<vmem>>, vector<1x48x16xbf16>
    %22 = vector.shape_cast %21 : vector<1x48x16xbf16> to vector<48x16xbf16>
    %c48_31 = arith.constant 48 : index
    %c16 = arith.constant 16 : index
    %23 = vector.load %arg12[%c48_31, %c16] : memref<192x64xbf16, #tpu.memory_space<vmem>>, vector<48x16xbf16>
    tpu.vector_store %arg12[%c48_31, %c16], %22 {strides = array<i32>} : memref<192x64xbf16, #tpu.memory_space<vmem>>, vector<48x16xbf16>,
    %c2 = arith.constant 2 : index
    %c0_32 = arith.constant 0 : index
    %c0_33 = arith.constant 0 : index
    %24 = vector.load %arg3[%c2, %c0_32, %c0_33] : memref<4x32x64xbf16, #tpu.memory_space<vmem>>, vector<1x32x64xbf16>
    %25 = vector.shape_cast %24 : vector<1x32x64xbf16> to vector<32x64xbf16>
    %c64_34 = arith.constant 64 : index
    %c128 = arith.constant 128 : index
    %26 = vector.load %arg10[%c64_34, %c128] : memref<128x256xbf16, #tpu.memory_space<vmem>>, vector<32x64xbf16>
    tpu.vector_store %arg10[%c64_34, %c128], %25 {strides = array<i32>} : memref<128x256xbf16, #tpu.memory_space<vmem>>, vector<32x64xbf16>,
    %c2_35 = arith.constant 2 : index
    %c0_36 = arith.constant 0 : index
    %c0_37 = arith.constant 0 : index
    %27 = vector.load %arg5[%c2_35, %c0_36, %c0_37] : memref<4x64x48xbf16, #tpu.memory_space<vmem>>, vector<1x64x48xbf16>
    %28 = vector.shape_cast %27 : vector<1x64x48xbf16> to vector<64x48xbf16>
    %c128_38 = arith.constant 128 : index
    %c96 = arith.constant 96 : index
    %29 = vector.load %arg11[%c128_38, %c96] : memref<256x192xbf16, #tpu.memory_space<vmem>>, vector<64x48xbf16>
    tpu.vector_store %arg11[%c128_38, %c96], %28 {strides = array<i32>} : memref<256x192xbf16, #tpu.memory_space<vmem>>, vector<64x48xbf16>,
    %c2_39 = arith.constant 2 : index
    %c0_40 = arith.constant 0 : index
    %c0_41 = arith.constant 0 : index
    %30 = vector.load %arg7[%c2_39, %c0_40, %c0_41] : memref<4x48x16xbf16, #tpu.memory_space<vmem>>, vector<1x48x16xbf16>
    %31 = vector.shape_cast %30 : vector<1x48x16xbf16> to vector<48x16xbf16>
    %c96_42 = arith.constant 96 : index
    %c32_43 = arith.constant 32 : index
    %32 = vector.load %arg12[%c96_42, %c32_43] : memref<192x64xbf16, #tpu.memory_space<vmem>>, vector<48x16xbf16>
    tpu.vector_store %arg12[%c96_42, %c32_43], %31 {strides = array<i32>} : memref<192x64xbf16, #tpu.memory_space<vmem>>, vector<48x16xbf16>,
    %c3 = arith.constant 3 : index
    %c0_44 = arith.constant 0 : index
    %c0_45 = arith.constant 0 : index
    %33 = vector.load %arg3[%c3, %c0_44, %c0_45] : memref<4x32x64xbf16, #tpu.memory_space<vmem>>, vector<1x32x64xbf16>
    %34 = vector.shape_cast %33 : vector<1x32x64xbf16> to vector<32x64xbf16>
    %c96_46 = arith.constant 96 : index
    %c192 = arith.constant 192 : index
    %35 = vector.load %arg10[%c96_46, %c192] : memref<128x256xbf16, #tpu.memory_space<vmem>>, vector<32x64xbf16>
    tpu.vector_store %arg10[%c96_46, %c192], %34 {strides = array<i32>} : memref<128x256xbf16, #tpu.memory_space<vmem>>, vector<32x64xbf16>,
    %c3_47 = arith.constant 3 : index
    %c0_48 = arith.constant 0 : index
    %c0_49 = arith.constant 0 : index
    %36 = vector.load %arg5[%c3_47, %c0_48, %c0_49] : memref<4x64x48xbf16, #tpu.memory_space<vmem>>, vector<1x64x48xbf16>
    %37 = vector.shape_cast %36 : vector<1x64x48xbf16> to vector<64x48xbf16>
    %c192_50 = arith.constant 192 : index
    %c144 = arith.constant 144 : index
    %38 = vector.load %arg11[%c192_50, %c144] : memref<256x192xbf16, #tpu.memory_space<vmem>>, vector<64x48xbf16>
    tpu.vector_store %arg11[%c192_50, %c144], %37 {strides = array<i32>} : memref<256x192xbf16, #tpu.memory_space<vmem>>, vector<64x48xbf16>,
    %c3_51 = arith.constant 3 : index
    %c0_52 = arith.constant 0 : index
    %c0_53 = arith.constant 0 : index
    %39 = vector.load %arg7[%c3_51, %c0_52, %c0_53] : memref<4x48x16xbf16, #tpu.memory_space<vmem>>, vector<1x48x16xbf16>
    %40 = vector.shape_cast %39 : vector<1x48x16xbf16> to vector<48x16xbf16>
    %c144_54 = arith.constant 144 : index
    %c48_55 = arith.constant 48 : index
    %41 = vector.load %arg12[%c144_54, %c48_55] : memref<192x64xbf16, #tpu.memory_space<vmem>>, vector<48x16xbf16>
    tpu.vector_store %arg12[%c144_54, %c48_55], %40 {strides = array<i32>} : memref<192x64xbf16, #tpu.memory_space<vmem>>, vector<48x16xbf16>,
    %c0_56 = arith.constant 0 : index
    %c0_57 = arith.constant 0 : index
    %42 = vector.load %arg10[%c0_56, %c0_57] : memref<128x256xbf16, #tpu.memory_space<vmem>>, vector<128x256xbf16>
    %c0_58 = arith.constant 0 : index
    %c0_59 = arith.constant 0 : index
    %43 = vector.load %arg11[%c0_58, %c0_59] : memref<256x192xbf16, #tpu.memory_space<vmem>>, vector<256x192xbf16>
    %c0_60 = arith.constant 0 : index
    %c0_61 = arith.constant 0 : index
    %44 = vector.load %arg12[%c0_60, %c0_61] : memref<192x64xbf16, #tpu.memory_space<vmem>>, vector<192x64xbf16>
    %c0_62 = arith.constant 0 : index
    %c0_63 = arith.constant 0 : index
    %45 = vector.load %arg2[%c0_62, %c0_63] : memref<8x128xbf16, #tpu.memory_space<vmem>>, vector<8x128xbf16>
    %c0_64 = arith.constant 0 : index
    %c0_65 = arith.constant 0 : index
    %46 = vector.load %arg4[%c0_64, %c0_65] : memref<2x256xf32, #tpu.memory_space<vmem>>, vector<1x256xf32>
    %c1_66 = arith.constant 1 : index
    %c0_67 = arith.constant 0 : index
    %47 = vector.load %arg4[%c1_66, %c0_67] : memref<2x256xf32, #tpu.memory_space<vmem>>, vector<1x256xf32>
    %c0_68 = arith.constant 0 : index
    %c0_69 = arith.constant 0 : index
    %48 = vector.load %arg6[%c0_68, %c0_69] : memref<2x192xf32, #tpu.memory_space<vmem>>, vector<1x192xf32>
    %c1_70 = arith.constant 1 : index
    %c0_71 = arith.constant 0 : index
    %49 = vector.load %arg6[%c1_70, %c0_71] : memref<2x192xf32, #tpu.memory_space<vmem>>, vector<1x192xf32>
    %c0_72 = arith.constant 0 : index
    %c0_73 = arith.constant 0 : index
    %50 = vector.load %arg8[%c0_72, %c0_73] : memref<1x64xf32, #tpu.memory_space<vmem>>, vector<1x64xf32>
    %cst_74 = arith.constant dense<0.000000e+00> : vector<8x256xf32>
    %51 = tpu.matmul %45, %42, %cst_74 {dimension_numbers = #tpu.dot_dimension_numbers<[1], [0], [0], [1], [0, 0, 1, 1], [], []>} : vector<8x128xbf16>, vector<128x256xbf16>, vector<8x256xf32> -> vector<8x256xf32>
    %52 = vector.broadcast %46 : vector<1x256xf32> to vector<8x256xf32>
    %53 = arith.mulf %51, %52 : vector<8x256xf32>
    %54 = vector.broadcast %47 : vector<1x256xf32> to vector<8x256xf32>
    %55 = arith.addf %53, %54 : vector<8x256xf32>
    %cst_75 = arith.constant 0.000000e+00 : f32
    %56 = vector.broadcast %cst_75 : f32 to vector<8x256xf32>
    %57 = arith.maximumf %55, %56 : vector<8x256xf32>
    %58 = arith.truncf %57 : vector<8x256xf32> to vector<8x256xbf16>
    %cst_76 = arith.constant dense<0.000000e+00> : vector<8x192xf32>
    %59 = tpu.matmul %58, %43, %cst_76 {dimension_numbers = #tpu.dot_dimension_numbers<[1], [0], [0], [1], [0, 0, 1, 1], [], []>} : vector<8x256xbf16>, vector<256x192xbf16>, vector<8x192xf32> -> vector<8x192xf32>
    %60 = vector.broadcast %48 : vector<1x192xf32> to vector<8x192xf32>
    %61 = arith.mulf %59, %60 : vector<8x192xf32>
    %62 = vector.broadcast %49 : vector<1x192xf32> to vector<8x192xf32>
    %63 = arith.addf %61, %62 : vector<8x192xf32>
    %cst_77 = arith.constant 0.000000e+00 : f32
    %64 = vector.broadcast %cst_77 : f32 to vector<8x192xf32>
    %65 = arith.maximumf %63, %64 : vector<8x192xf32>
    %66 = arith.truncf %65 : vector<8x192xf32> to vector<8x192xbf16>
    %cst_78 = arith.constant dense<0.000000e+00> : vector<8x64xf32>
    %67 = tpu.matmul %66, %44, %cst_78 {dimension_numbers = #tpu.dot_dimension_numbers<[1], [0], [0], [1], [0, 0, 1, 1], [], []>} : vector<8x192xbf16>, vector<192x64xbf16>, vector<8x64xf32> -> vector<8x64xf32>
    %68 = vector.broadcast %50 : vector<1x64xf32> to vector<8x64xf32>
    %69 = arith.addf %67, %68 : vector<8x64xf32>
    %c0_79 = arith.constant 0 : index
    %c0_80 = arith.constant 0 : index
    %70 = vector.load %arg9[%c0_79, %c0_80] : memref<8x64xf32, #tpu.memory_space<vmem>>, vector<8x64xf32>
    tpu.vector_store %arg9[%c0_79, %c0_80], %69 {strides = array<i32>} : memref<8x64xf32, #tpu.memory_space<vmem>>, vector<8x64xf32>,
    return
  }
  func.func @transform_0(%arg0: i32, %arg1: i32) -> (i32, i32) {
    %c0_i32 = arith.constant 0 : i32
    return %arg1, %arg0 : i32, i32
  }
  func.func @transform_1(%arg0: i32, %arg1: i32) -> (i32, i32, i32) {
    %c0_i32 = arith.constant 0 : i32
    %c0_i32_0 = arith.constant 0 : i32
    %c0_i32_1 = arith.constant 0 : i32
    return %arg0, %c0_i32, %c0_i32_0 : i32, i32, i32
  }
  func.func @transform_2(%arg0: i32, %arg1: i32) -> (i32, i32) {
    %c0_i32 = arith.constant 0 : i32
    %c0_i32_0 = arith.constant 0 : i32
    return %c0_i32, %arg0 : i32, i32
  }
  func.func @transform_3(%arg0: i32, %arg1: i32) -> (i32, i32, i32) {
    %c0_i32 = arith.constant 0 : i32
    %c0_i32_0 = arith.constant 0 : i32
    %c0_i32_1 = arith.constant 0 : i32
    return %arg0, %c0_i32, %c0_i32_0 : i32, i32, i32
  }
  func.func @transform_4(%arg0: i32, %arg1: i32) -> (i32, i32) {
    %c0_i32 = arith.constant 0 : i32
    %c0_i32_0 = arith.constant 0 : i32
    return %c0_i32, %arg0 : i32, i32
  }
  func.func @transform_5(%arg0: i32, %arg1: i32) -> (i32, i32, i32) {
    %c0_i32 = arith.constant 0 : i32
    %c0_i32_0 = arith.constant 0 : i32
    %c0_i32_1 = arith.constant 0 : i32
    return %arg0, %c0_i32, %c0_i32_0 : i32, i32, i32
  }
  func.func @transform_6(%arg0: i32, %arg1: i32) -> (i32, i32) {
    %c0_i32 = arith.constant 0 : i32
    %c0_i32_0 = arith.constant 0 : i32
    return %c0_i32, %arg0 : i32, i32
  }
  func.func @transform_7(%arg0: i32, %arg1: i32) -> (i32, i32) {
    %c0_i32 = arith.constant 0 : i32
    return %arg1, %arg0 : i32, i32
  }
}

</mosaic_0001>

<llo_original>
// kernel: cell_forward.1
$region0: #{cell_forward.1}
  #allocation0 [shape = 'u32[]', space=smem, size = 0x4, offset = 0x4, fixed_abs, tag = 'smem constant byte address 0x4 - core index']
  #allocation1 [shape = 'u32[144,128]{1,0:T(1,128)}', space=vmem, size = 0x12000, scoped, tag = 'internal scratch']
  #allocation2 [shape = 'bf16[128,256]{1,0:T(16,128)(2,1)}', space=vmem, size = 0x10000, scoped, tag = 'scratch operand']
  #allocation3 [shape = 'bf16[256,192]{1,0:T(16,128)(2,1)}', space=vmem, size = 0x20000, scoped, tag = 'scratch operand']
  #allocation4 [shape = 'bf16[192,64]{1,0:T(16,128)(2,1)}', space=vmem, size = 0xc000, scoped, tag = 'scratch operand']
  %s0 = inlined_call_operand.vmem [shape: bf16[8,128], index: 0, kind: input, shape index: {}]
  %s1 = inlined_call_operand.vmem [shape: bf16[4,32,64], index: 1, kind: input, shape index: {}]
  %s2 = inlined_call_operand.vmem [shape: f32[2,256], index: 2, kind: input, shape index: {}]
  %s3 = inlined_call_operand.vmem [shape: bf16[4,64,48], index: 3, kind: input, shape index: {}]
  %s4 = inlined_call_operand.vmem [shape: f32[2,192], index: 4, kind: input, shape index: {}]
  %s5 = inlined_call_operand.vmem [shape: bf16[4,48,16], index: 5, kind: input, shape index: {}]
  %s6 = inlined_call_operand.vmem [shape: f32[1,64], index: 6, kind: input, shape index: {}]
  %s7 = inlined_call_operand.hbm [shape: f32[8,64], index: 7, kind: output, shape index: {}]
  %s8 = sld [smem:[#allocation0]]
  $region38: #{cell_forward.1} parent=0
    _
  %s10 = ssub.s32 1, %s8
  %s11 = scalar_select 0, %s10, %s8
  $region1: #{cell_forward.1} parent=0
    #allocation5 [shape = 'u8[4096]{0}', space=vmem, size = 0x1000, scoped, tag = 'output window, operand 0, single buffered']
    #allocation6 [shape = 's32[1]{0}', space=sflag, size = 0x4, scoped, tag = 'scoped memory for cell_forward.1']
    %12 = vsyncpa [#allocation6], 0
    // Predicated region
    $region2: #{cell_forward.1} parent=1 // pred_check
      _
    $region3: #{cell_forward.1} parent=1 // pred_check_branch
      %14 = sbr.rel (0) target = $region5
    $region4: #{cell_forward.1} parent=1 // pred_region
      _
    $region5: #{cell_forward.1} parent=1 // pred_fallthru
      _
    // Predicated region
    $region6: #{cell_forward.1} parent=1 // pred_check
      _
    $region7: #{cell_forward.1} parent=1 // pred_check_branch
      %16 = sbr.rel (0) target = $region9
    $region8: #{cell_forward.1} parent=1 // pred_region
      _
    $region9: #{cell_forward.1} parent=1 // pred_fallthru
      _
    // Predicated region
    $region10: #{cell_forward.1} parent=1 // pred_check
      _
    $region11: #{cell_forward.1} parent=1 // pred_check_branch
      %18 = sbr.rel (0) target = $region13
    $region12: #{cell_forward.1} parent=1 // pred_region
      _
    $region13: #{cell_forward.1} parent=1 // pred_fallthru
      _
    // Predicated region
    $region14: #{cell_forward.1} parent=1 // pred_check
      _
    $region15: #{cell_forward.1} parent=1 // pred_check_branch
      %20 = sbr.rel (0) target = $region17
    $region16: #{cell_forward.1} parent=1 // pred_region
      _
    $region17: #{cell_forward.1} parent=1 // pred_fallthru
      _
    // Predicated region
    $region18: #{cell_forward.1} parent=1 // pred_check
      _
    $region19: #{cell_forward.1} parent=1 // pred_check_branch
      %22 = sbr.rel (0) target = $region21
    $region20: #{cell_forward.1} parent=1 // pred_region
      _
    $region21: #{cell_forward.1} parent=1 // pred_fallthru
      _
    // Predicated region
    $region22: #{cell_forward.1} parent=1 // pred_check
      _
    $region23: #{cell_forward.1} parent=1 // pred_check_branch
      %24 = sbr.rel (0) target = $region25
    $region24: #{cell_forward.1} parent=1 // pred_region
      _
    $region25: #{cell_forward.1} parent=1 // pred_fallthru
      _
    // Predicated region
    $region26: #{cell_forward.1} parent=1 // pred_check
      _
    $region27: #{cell_forward.1} parent=1 // pred_check_branch
      %26 = sbr.rel (0) target = $region29
    $region28: #{cell_forward.1} parent=1 // pred_region
      _
    $region29: #{cell_forward.1} parent=1 // pred_fallthru
      _
    %28 = vst [vmem:[#allocation2] sm:$0xff] 0
    %29 = vst [vmem:[#allocation2 + $0x8] sm:$0xff] 0
    %30 = vst [vmem:[#allocation2 + $0x10] sm:$0xff] 0
    %31 = vst [vmem:[#allocation2 + $0x18] sm:$0xff] 0
    %32 = vst [vmem:[#allocation2 + $0x20] sm:$0xff] 0
    %33 = vst [vmem:[#allocation2 + $0x28] sm:$0xff] 0
    %34 = vst [vmem:[#allocation2 + $0x30] sm:$0xff] 0
    %35 = vst [vmem:[#allocation2 + $0x38] sm:$0xff] 0
    %36 = vst [vmem:[#allocation2 + $0x40] sm:$0xff] 0
    %37 = vst [vmem:[#allocation2 + $0x48] sm:$0xff] 0
    %38 = vst [vmem:[#allocation2 + $0x50] sm:$0xff] 0
    %39 = vst [vmem:[#allocation2 + $0x58] sm:$0xff] 0
    %40 = vst [vmem:[#allocation2 + $0x60] sm:$0xff] 0
    %41 = vst [vmem:[#allocation2 + $0x68] sm:$0xff] 0
    %42 = vst [vmem:[#allocation2 + $0x70] sm:$0xff] 0
    %43 = vst [vmem:[#allocation2 + $0x78] sm:$0xff] 0
    %44 = vst [vmem:[#allocation3] sm:$0xff] 0
    %vm45 = vcmask 523264
    %46 = vst.msk [vmem:[#allocation3 + $0x8] sm:$0xff] %vm45, 0
    %47 = vst [vmem:[#allocation3 + $0x10] sm:$0xff] 0
    %48 = vst.msk [vmem:[#allocation3 + $0x18] sm:$0xff] %vm45, 0
    %49 = vst [vmem:[#allocation3 + $0x20] sm:$0xff] 0
    %50 = vst.msk [vmem:[#allocation3 + $0x28] sm:$0xff] %vm45, 0
    %51 = vst [vmem:[#allocation3 + $0x30] sm:$0xff] 0
    %52 = vst.msk [vmem:[#allocation3 + $0x38] sm:$0xff] %vm45, 0
    %53 = vst [vmem:[#allocation3 + $0x40] sm:$0xff] 0
    %54 = vst.msk [vmem:[#allocation3 + $0x48] sm:$0xff] %vm45, 0
    %55 = vst [vmem:[#allocation3 + $0x50] sm:$0xff] 0
    %56 = vst.msk [vmem:[#allocation3 + $0x58] sm:$0xff] %vm45, 0
    %57 = vst [vmem:[#allocation3 + $0x60] sm:$0xff] 0
    %58 = vst.msk [vmem:[#allocation3 + $0x68] sm:$0xff] %vm45, 0
    %59 = vst [vmem:[#allocation3 + $0x70] sm:$0xff] 0
    %60 = vst.msk [vmem:[#allocation3 + $0x78] sm:$0xff] %vm45, 0
    %61 = vst [vmem:[#allocation3 + $0x80] sm:$0xff] 0
    %62 = vst.msk [vmem:[#allocation3 + $0x88] sm:$0xff] %vm45, 0
    %63 = vst [vmem:[#allocation3 + $0x90] sm:$0xff] 0
    %64 = vst.msk [vmem:[#allocation3 + $0x98] sm:$0xff] %vm45, 0
    %65 = vst [vmem:[#allocation3 + $0xa0] sm:$0xff] 0
    %66 = vst.msk [vmem:[#allocation3 + $0xa8] sm:$0xff] %vm45, 0
    %67 = vst [vmem:[#allocation3 + $0xb0] sm:$0xff] 0
    %68 = vst.msk [vmem:[#allocation3 + $0xb8] sm:$0xff] %vm45, 0
    %69 = vst [vmem:[#allocation3 + $0xc0] sm:$0xff] 0
    %70 = vst.msk [vmem:[#allocation3 + $0xc8] sm:$0xff] %vm45, 0
    %71 = vst [vmem:[#allocation3 + $0xd0] sm:$0xff] 0
    %72 = vst.msk [vmem:[#allocation3 + $0xd8] sm:$0xff] %vm45, 0
    %73 = vst [vmem:[#allocation3 + $0xe0] sm:$0xff] 0
    %74 = vst.msk [vmem:[#allocation3 + $0xe8] sm:$0xff] %vm45, 0
    %75 = vst [vmem:[#allocation3 + $0xf0] sm:$0xff] 0
    %76 = vst.msk [vmem:[#allocation3 + $0xf8] sm:$0xff] %vm45, 0
    %77 = vst.msk [vmem:[#allocation4] sm:$0xff] %vm45, 0
    %78 = vst.msk [vmem:[#allocation4 + $0x8] sm:$0xff] %vm45, 0
    %79 = vst.msk [vmem:[#allocation4 + $0x10] sm:$0xff] %vm45, 0
    %80 = vst.msk [vmem:[#allocation4 + $0x18] sm:$0xff] %vm45, 0
    %81 = vst.msk [vmem:[#allocation4 + $0x20] sm:$0xff] %vm45, 0
    %82 = vst.msk [vmem:[#allocation4 + $0x28] sm:$0xff] %vm45, 0
    %83 = vst.msk [vmem:[#allocation4 + $0x30] sm:$0xff] %vm45, 0
    %84 = vst.msk [vmem:[#allocation4 + $0x38] sm:$0xff] %vm45, 0
    %85 = vst.msk [vmem:[#allocation4 + $0x40] sm:$0xff] %vm45, 0
    %86 = vst.msk [vmem:[#allocation4 + $0x48] sm:$0xff] %vm45, 0
    %87 = vst.msk [vmem:[#allocation4 + $0x50] sm:$0xff] %vm45, 0
    %88 = vst.msk [vmem:[#allocation4 + $0x58] sm:$0xff] %vm45, 0
    %v89 = vld [vmem:[%s1] sm:$0xf]
    %v90 = vld [vmem:[%s1 + $0x4] sm:$0xf]
    %v91 = vld [vmem:[%s1 + $0x8] sm:$0xf]
    %v92 = vld [vmem:[%s1 + $0xc] sm:$0xf]
    %v97 = vunpack.c.l.b16 %v89
    %v98 = vunpack.c.l.b16 %v90
    %v99 = vunpack.c.l.b16 %v91
    %v100 = vunpack.c.l.b16 %v92
    %v101 = vpack.c.b16 %v98, %v97
    %v102 = vpack.c.b16 %v100, %v99
    %105 = vst.msk [vmem:[#allocation2] sm:$0xff] %vm45, %v101
    %106 = vst.msk [vmem:[#allocation2 + $0x10] sm:$0xff] %vm45, %v102
    %v107 = vld [vmem:[%s3] sm:$0xf]
    %v108 = vld [vmem:[%s3 + $0x4] sm:$0xf]
    %v109 = vld [vmem:[%s3 + $0x8] sm:$0xf]
    %v110 = vld [vmem:[%s3 + $0xc] sm:$0xf]
    %v111 = vld [vmem:[%s3 + $0x10] sm:$0xf]
    %v112 = vld [vmem:[%s3 + $0x14] sm:$0xf]
    %v113 = vld [vmem:[%s3 + $0x18] sm:$0xf]
    %v114 = vld [vmem:[%s3 + $0x1c] sm:$0xf]
    %v123 = vunpack.c.l.b16 %v107
    %v124 = vunpack.c.l.b16 %v108
    %v125 = vunpack.c.l.b16 %v109
    %v126 = vunpack.c.l.b16 %v110
    %v127 = vunpack.c.l.b16 %v111
    %v128 = vunpack.c.l.b16 %v112
    %v129 = vunpack.c.l.b16 %v113
    %v130 = vunpack.c.l.b16 %v114
    %v131 = vpack.c.b16 %v124, %v123
    %v132 = vpack.c.b16 %v126, %v125
    %v133 = vpack.c.b16 %v128, %v127
    %v134 = vpack.c.b16 %v130, %v129
    %vm139 = vcmask 392192
    %140 = vst.msk [vmem:[#allocation3] sm:$0xff] %vm139, %v131
    %141 = vst.msk [vmem:[#allocation3 + $0x10] sm:$0xff] %vm139, %v132
    %142 = vst.msk [vmem:[#allocation3 + $0x20] sm:$0xff] %vm139, %v133
    %143 = vst.msk [vmem:[#allocation3 + $0x30] sm:$0xff] %vm139, %v134
    %v144 = vld [vmem:[%s5] sm:$0xf]
    %v145 = vld [vmem:[%s5 + $0x4] sm:$0xf]
    %v146 = vld [vmem:[%s5 + $0x8] sm:$0xf]
    %v147 = vld [vmem:[%s5 + $0xc] sm:$0xf]
    %v148 = vld [vmem:[%s5 + $0x10] sm:$0xf]
    %v149 = vld [vmem:[%s5 + $0x14] sm:$0xf]
    %v156 = vunpack.c.l.b16 %v144
    %v157 = vunpack.c.l.b16 %v145
    %v158 = vunpack.c.l.b16 %v146
    %v159 = vunpack.c.l.b16 %v147
    %v160 = vunpack.c.l.b16 %v148
    %v161 = vunpack.c.l.b16 %v149
    %v162 = vpack.c.b16 %v157, %v156
    %v163 = vpack.c.b16 %v159, %v158
    %v164 = vpack.c.b16 %v161, %v160
    %vm168 = vcmask 130048
    %169 = vst.msk [vmem:[#allocation4] sm:$0xff] %vm168, %v162
    %170 = vst.msk [vmem:[#allocation4 + $0x8] sm:$0xff] %vm168, %v163
    %171 = vst.msk [vmem:[#allocation4 + $0x10] sm:$0xff] %vm168, %v164
    %s172 = scalar_lea.vmem %s1, 16
    %v173 = vld [vmem:[%s172] sm:$0xf]
    %v174 = vld [vmem:[%s172 + $0x4] sm:$0xf]
    %v175 = vld [vmem:[%s172 + $0x8] sm:$0xf]
    %v176 = vld [vmem:[%s172 + $0xc] sm:$0xf]
    %v181 = vunpack.c.l.b16 %v173
    %v182 = vunpack.c.l.b16 %v174
    %v183 = vunpack.c.l.b16 %v175
    %v184 = vunpack.c.l.b16 %v176
    %v185 = vpack.c.b16 %v182, %v181
    %v186 = vpack.c.b16 %v184, %v183
    %187 = vrot.lane.b32.xlu0 %v185, 64
    %v188 = vpop.permute.xlu0 %187
    %189 = vrot.lane.b32.xlu0 %v186, 64
    %v190 = vpop.permute.xlu0 %189
    %vm193 = vcmask 1048064
    %194 = vst.msk [vmem:[#allocation2 + $0x20] sm:$0xff] %vm193, %v188
    %195 = vst.msk [vmem:[#allocation2 + $0x30] sm:$0xff] %vm193, %v190
    %s196 = scalar_lea.vmem %s3, 32
    %v197 = vld [vmem:[%s196] sm:$0xf]
    %v198 = vld [vmem:[%s196 + $0x4] sm:$0xf]
    %v199 = vld [vmem:[%s196 + $0x8] sm:$0xf]
    %v200 = vld [vmem:[%s196 + $0xc] sm:$0xf]
    %v201 = vld [vmem:[%s196 + $0x10] sm:$0xf]
    %v202 = vld [vmem:[%s196 + $0x14] sm:$0xf]
    %v203 = vld [vmem:[%s196 + $0x18] sm:$0xf]
    %v204 = vld [vmem:[%s196 + $0x1c] sm:$0xf]
    %v213 = vunpack.c.l.b16 %v197
    %v214 = vunpack.c.l.b16 %v198
    %v215 = vunpack.c.l.b16 %v199
    %v216 = vunpack.c.l.b16 %v200
    %v217 = vunpack.c.l.b16 %v201
    %v218 = vunpack.c.l.b16 %v202
    %v219 = vunpack.c.l.b16 %v203
    %v220 = vunpack.c.l.b16 %v204
    %v221 = vpack.c.b16 %v214, %v213
    %v222 = vpack.c.b16 %v216, %v215
    %v223 = vpack.c.b16 %v218, %v217
    %v224 = vpack.c.b16 %v220, %v219
    %225 = vrot.lane.b32.xlu0 %v221, 48
    %v226 = vpop.permute.xlu0 %225
    %227 = vrot.lane.b32.xlu0 %v222, 48
    %v228 = vpop.permute.xlu0 %227
    %229 = vrot.lane.b32.xlu0 %v223, 48
    %v230 = vpop.permute.xlu0 %229
    %231 = vrot.lane.b32.xlu0 %v224, 48
    %v232 = vpop.permute.xlu0 %231
    %vm237 = vcmask 785792
    %238 = vst.msk [vmem:[#allocation3 + $0x40] sm:$0xff] %vm237, %v226
    %239 = vst.msk [vmem:[#allocation3 + $0x50] sm:$0xff] %vm237, %v228
    %240 = vst.msk [vmem:[#allocation3 + $0x60] sm:$0xff] %vm237, %v230
    %241 = vst.msk [vmem:[#allocation3 + $0x70] sm:$0xff] %vm237, %v232
    %s242 = scalar_lea.vmem %s5, 24
    %v243 = vld [vmem:[%s242] sm:$0xf]
    %v244 = vld [vmem:[%s242 + $0x4] sm:$0xf]
    %v245 = vld [vmem:[%s242 + $0x8] sm:$0xf]
    %v246 = vld [vmem:[%s242 + $0xc] sm:$0xf]
    %v247 = vld [vmem:[%s242 + $0x10] sm:$0xf]
    %v248 = vld [vmem:[%s242 + $0x14] sm:$0xf]
    %v255 = vunpack.c.l.b16 %v243
    %v256 = vunpack.c.l.b16 %v244
    %v257 = vunpack.c.l.b16 %v245
    %v258 = vunpack.c.l.b16 %v246
    %v259 = vunpack.c.l.b16 %v247
    %v260 = vunpack.c.l.b16 %v248
    %v261 = vpack.c.b16 %v256, %v255
    %v262 = vpack.c.b16 %v258, %v257
    %v263 = vpack.c.b16 %v260, %v259
    %264 = vrot.lane.b32.xlu0 %v261, 16
    %v265 = vpop.permute.xlu0 %264
    %266 = vrot.lane.b32.xlu0 %v262, 16
    %v267 = vpop.permute.xlu0 %266
    %268 = vrot.lane.b32.xlu0 %v263, 16
    %v269 = vpop.permute.xlu0 %268
    %vm273 = vcmask 261248
    %274 = vst.msk [vmem:[#allocation4 + $0x18] sm:$0xff] %vm273, %v265
    %275 = vst.msk [vmem:[#allocation4 + $0x20] sm:$0xff] %vm273, %v267
    %276 = vst.msk [vmem:[#allocation4 + $0x28] sm:$0xff] %vm273, %v269
    %s277 = scalar_lea.vmem %s1, 32
    %v278 = vld [vmem:[%s277] sm:$0xf]
    %v279 = vld [vmem:[%s277 + $0x4] sm:$0xf]
    %v280 = vld [vmem:[%s277 + $0x8] sm:$0xf]
    %v281 = vld [vmem:[%s277 + $0xc] sm:$0xf]
    %v286 = vunpack.c.l.b16 %v278
    %v287 = vunpack.c.l.b16 %v279
    %v288 = vunpack.c.l.b16 %v280
    %v289 = vunpack.c.l.b16 %v281
    %v290 = vpack.c.b16 %v287, %v286
    %v291 = vpack.c.b16 %v289, %v288
    %294 = vst.msk [vmem:[#allocation2 + $0x48] sm:$0xff] %vm45, %v290
    %295 = vst.msk [vmem:[#allocation2 + $0x58] sm:$0xff] %vm45, %v291
    %s296 = scalar_lea.vmem %s3, 64
    %v297 = vld [vmem:[%s296] sm:$0xf]
    %v298 = vld [vmem:[%s296 + $0x4] sm:$0xf]
    %v299 = vld [vmem:[%s296 + $0x8] sm:$0xf]
    %v300 = vld [vmem:[%s296 + $0xc] sm:$0xf]
    %v301 = vld [vmem:[%s296 + $0x10] sm:$0xf]
    %v302 = vld [vmem:[%s296 + $0x14] sm:$0xf]
    %v303 = vld [vmem:[%s296 + $0x18] sm:$0xf]
    %v304 = vld [vmem:[%s296 + $0x1c] sm:$0xf]
    %v313 = vunpack.c.l.b16 %v297
    %v314 = vunpack.c.l.b16 %v298
    %v315 = vunpack.c.l.b16 %v299
    %v316 = vunpack.c.l.b16 %v300
    %v317 = vunpack.c.l.b16 %v301
    %v318 = vunpack.c.l.b16 %v302
    %v319 = vunpack.c.l.b16 %v303
    %v320 = vunpack.c.l.b16 %v304
    %v321 = vpack.c.b16 %v314, %v313
    %v322 = vpack.c.b16 %v316, %v315
    %v323 = vpack.c.b16 %v318, %v317
    %v324 = vpack.c.b16 %v320, %v319
    %325 = vrot.lane.b32.xlu0 %v321, 96
    %v326 = vpop.permute.xlu0 %325
    %327 = vrot.lane.b32.xlu0 %v322, 96
    %v328 = vpop.permute.xlu0 %327
    %329 = vrot.lane.b32.xlu0 %v323, 96
    %v330 = vpop.permute.xlu0 %329
    %331 = vrot.lane.b32.xlu0 %v324, 96
    %v332 = vpop.permute.xlu0 %331
    %vm337 = vcmask 1048320
    %338 = vst.msk [vmem:[#allocation3 + $0x80] sm:$0xff] %vm337, %v326
    %339 = vst.msk [vmem:[#allocation3 + $0x88] sm:$0xff] %vm168, %v326
    %340 = vst.msk [vmem:[#allocation3 + $0x90] sm:$0xff] %vm337, %v328
    %341 = vst.msk [vmem:[#allocation3 + $0x98] sm:$0xff] %vm168, %v328
    %342 = vst.msk [vmem:[#allocation3 + $0xa0] sm:$0xff] %vm337, %v330
    %343 = vst.msk [vmem:[#allocation3 + $0xa8] sm:$0xff] %vm168, %v330
    %344 = vst.msk [vmem:[#allocation3 + $0xb0] sm:$0xff] %vm337, %v332
    %345 = vst.msk [vmem:[#allocation3 + $0xb8] sm:$0xff] %vm168, %v332
    %s346 = scalar_lea.vmem %s5, 48
    %v347 = vld [vmem:[%s346] sm:$0xf]
    %v348 = vld [vmem:[%s346 + $0x4] sm:$0xf]
    %v349 = vld [vmem:[%s346 + $0x8] sm:$0xf]
    %v350 = vld [vmem:[%s346 + $0xc] sm:$0xf]
    %v351 = vld [vmem:[%s346 + $0x10] sm:$0xf]
    %v352 = vld [vmem:[%s346 + $0x14] sm:$0xf]
    %v359 = vunpack.c.l.b16 %v347
    %v360 = vunpack.c.l.b16 %v348
    %v361 = vunpack.c.l.b16 %v349
    %v362 = vunpack.c.l.b16 %v350
    %v363 = vunpack.c.l.b16 %v351
    %v364 = vunpack.c.l.b16 %v352
    %v365 = vpack.c.b16 %v360, %v359
    %v366 = vpack.c.b16 %v362, %v361
    %v367 = vpack.c.b16 %v364, %v363
    %368 = vrot.lane.b32.xlu0 %v365, 32
    %v369 = vpop.permute.xlu0 %368
    %370 = vrot.lane.b32.xlu0 %v366, 32
    %v371 = vpop.permute.xlu0 %370
    %372 = vrot.lane.b32.xlu0 %v367, 32
    %v373 = vpop.permute.xlu0 %372
    %vm377 = vcmask 392448
    %378 = vst.msk [vmem:[#allocation4 + $0x30] sm:$0xff] %vm377, %v369
    %379 = vst.msk [vmem:[#allocation4 + $0x38] sm:$0xff] %vm377, %v371
    %380 = vst.msk [vmem:[#allocation4 + $0x40] sm:$0xff] %vm377, %v373
    %s381 = scalar_lea.vmem %s1, 48
    %v382 = vld [vmem:[%s381] sm:$0xf]
    %v383 = vld [vmem:[%s381 + $0x4] sm:$0xf]
    %v384 = vld [vmem:[%s381 + $0x8] sm:$0xf]
    %v385 = vld [vmem:[%s381 + $0xc] sm:$0xf]
    %v390 = vunpack.c.l.b16 %v382
    %v391 = vunpack.c.l.b16 %v383
    %v392 = vunpack.c.l.b16 %v384
    %v393 = vunpack.c.l.b16 %v385
    %v394 = vpack.c.b16 %v391, %v390
    %v395 = vpack.c.b16 %v393, %v392
    %396 = vrot.lane.b32.xlu0 %v394, 64
    %v397 = vpop.permute.xlu0 %396
    %398 = vrot.lane.b32.xlu0 %v395, 64
    %v399 = vpop.permute.xlu0 %398
    %402 = vst.msk [vmem:[#allocation2 + $0x68] sm:$0xff] %vm193, %v397
    %403 = vst.msk [vmem:[#allocation2 + $0x78] sm:$0xff] %vm193, %v399
    %s404 = scalar_lea.vmem %s3, 96
    %v405 = vld [vmem:[%s404] sm:$0xf]
    %v406 = vld [vmem:[%s404 + $0x4] sm:$0xf]
    %v407 = vld [vmem:[%s404 + $0x8] sm:$0xf]
    %v408 = vld [vmem:[%s404 + $0xc] sm:$0xf]
    %v409 = vld [vmem:[%s404 + $0x10] sm:$0xf]
    %v410 = vld [vmem:[%s404 + $0x14] sm:$0xf]
    %v411 = vld [vmem:[%s404 + $0x18] sm:$0xf]
    %v412 = vld [vmem:[%s404 + $0x1c] sm:$0xf]
    %v421 = vunpack.c.l.b16 %v405
    %v422 = vunpack.c.l.b16 %v406
    %v423 = vunpack.c.l.b16 %v407
    %v424 = vunpack.c.l.b16 %v408
    %v425 = vunpack.c.l.b16 %v409
    %v426 = vunpack.c.l.b16 %v410
    %v427 = vunpack.c.l.b16 %v411
    %v428 = vunpack.c.l.b16 %v412
    %v429 = vpack.c.b16 %v422, %v421
    %v430 = vpack.c.b16 %v424, %v423
    %v431 = vpack.c.b16 %v426, %v425
    %v432 = vpack.c.b16 %v428, %v427
    %433 = vrot.lane.b32.xlu0 %v429, 16
    %v434 = vpop.permute.xlu0 %433
    %435 = vrot.lane.b32.xlu0 %v430, 16
    %v436 = vpop.permute.xlu0 %435
    %437 = vrot.lane.b32.xlu0 %v431, 16
    %v438 = vpop.permute.xlu0 %437
    %439 = vrot.lane.b32.xlu0 %v432, 16
    %v440 = vpop.permute.xlu0 %439
    %vm445 = vcmask 523392
    %446 = vst.msk [vmem:[#allocation3 + $0xc8] sm:$0xff] %vm445, %v434
    %447 = vst.msk [vmem:[#allocation3 + $0xd8] sm:$0xff] %vm445, %v436
    %448 = vst.msk [vmem:[#allocation3 + $0xe8] sm:$0xff] %vm445, %v438
    %449 = vst.msk [vmem:[#allocation3 + $0xf8] sm:$0xff] %vm445, %v440
    %s450 = scalar_lea.vmem %s5, 72
    %v451 = vld [vmem:[%s450] sm:$0xf]
    %v452 = vld [vmem:[%s450 + $0x4] sm:$0xf]
    %v453 = vld [vmem:[%s450 + $0x8] sm:$0xf]
    %v454 = vld [vmem:[%s450 + $0xc] sm:$0xf]
    %v455 = vld [vmem:[%s450 + $0x10] sm:$0xf]
    %v456 = vld [vmem:[%s450 + $0x14] sm:$0xf]
    %v463 = vunpack.c.l.b16 %v451
    %v464 = vunpack.c.l.b16 %v452
    %v465 = vunpack.c.l.b16 %v453
    %v466 = vunpack.c.l.b16 %v454
    %v467 = vunpack.c.l.b16 %v455
    %v468 = vunpack.c.l.b16 %v456
    %v469 = vpack.c.b16 %v464, %v463
    %v470 = vpack.c.b16 %v466, %v465
    %v471 = vpack.c.b16 %v468, %v467
    %472 = vrot.lane.b32.xlu0 %v469, 48
    %v473 = vpop.permute.xlu0 %472
    %474 = vrot.lane.b32.xlu0 %v470, 48
    %v475 = vpop.permute.xlu0 %474
    %476 = vrot.lane.b32.xlu0 %v471, 48
    %v477 = vpop.permute.xlu0 %476
    %vm481 = vcmask 523648
    %482 = vst.msk [vmem:[#allocation4 + $0x48] sm:$0xff] %vm481, %v473
    %483 = vst.msk [vmem:[#allocation4 + $0x50] sm:$0xff] %vm481, %v475
    %484 = vst.msk [vmem:[#allocation4 + $0x58] sm:$0xff] %vm481, %v477
    %v485 = vld [vmem:[#allocation2] sm:$0xff]
    %v486 = vld [vmem:[#allocation2 + $0x8] sm:$0xff]
    %v487 = vld [vmem:[#allocation2 + $0x10] sm:$0xff]
    %v488 = vld [vmem:[#allocation2 + $0x18] sm:$0xff]
    %v489 = vld [vmem:[#allocation2 + $0x20] sm:$0xff]
    %v490 = vld [vmem:[#allocation2 + $0x28] sm:$0xff]
    %v491 = vld [vmem:[#allocation2 + $0x30] sm:$0xff]
    %v492 = vld [vmem:[#allocation2 + $0x38] sm:$0xff]
    %v493 = vld [vmem:[#allocation2 + $0x40] sm:$0xff]
    %v494 = vld [vmem:[#allocation2 + $0x48] sm:$0xff]
    %v495 = vld [vmem:[#allocation2 + $0x50] sm:$0xff]
    %v496 = vld [vmem:[#allocation2 + $0x58] sm:$0xff]
    %v497 = vld [vmem:[#allocation2 + $0x60] sm:$0xff]
    %v498 = vld [vmem:[#allocation2 + $0x68] sm:$0xff]
    %v499 = vld [vmem:[#allocation2 + $0x70] sm:$0xff]
    %v500 = vld [vmem:[#allocation2 + $0x78] sm:$0xff]
    %v501 = vld [vmem:[#allocation3] sm:$0xff]
    %v502 = vld [vmem:[#allocation3 + $0x8] sm:$0xff]
    %v503 = vld [vmem:[#allocation3 + $0x10] sm:$0xff]
    %v504 = vld [vmem:[#allocation3 + $0x18] sm:$0xff]
    %v505 = vld [vmem:[#allocation3 + $0x20] sm:$0xff]
    %v506 = vld [vmem:[#allocation3 + $0x28] sm:$0xff]
    %v507 = vld [vmem:[#allocation3 + $0x30] sm:$0xff]
    %v508 = vld [vmem:[#allocation3 + $0x38] sm:$0xff]
    %v509 = vld [vmem:[#allocation3 + $0x40] sm:$0xff]
    %v510 = vld [vmem:[#allocation3 + $0x48] sm:$0xff]
    %v511 = vld [vmem:[#allocation3 + $0x50] sm:$0xff]
    %v512 = vld [vmem:[#allocation3 + $0x58] sm:$0xff]
    %v513 = vld [vmem:[#allocation3 + $0x60] sm:$0xff]
    %v514 = vld [vmem:[#allocation3 + $0x68] sm:$0xff]
    %v515 = vld [vmem:[#allocation3 + $0x70] sm:$0xff]
    %v516 = vld [vmem:[#allocation3 + $0x78] sm:$0xff]
    %v517 = vld [vmem:[#allocation3 + $0x80] sm:$0xff]
    %v518 = vld [vmem:[#allocation3 + $0x88] sm:$0xff]
    %v519 = vld [vmem:[#allocation3 + $0x90] sm:$0xff]
    %v520 = vld [vmem:[#allocation3 + $0x98] sm:$0xff]
    %v521 = vld [vmem:[#allocation3 + $0xa0] sm:$0xff]
    %v522 = vld [vmem:[#allocation3 + $0xa8] sm:$0xff]
    %v523 = vld [vmem:[#allocation3 + $0xb0] sm:$0xff]
    %v524 = vld [vmem:[#allocation3 + $0xb8] sm:$0xff]
    %v525 = vld [vmem:[#allocation3 + $0xc0] sm:$0xff]
    %v526 = vld [vmem:[#allocation3 + $0xc8] sm:$0xff]
    %v527 = vld [vmem:[#allocation3 + $0xd0] sm:$0xff]
    %v528 = vld [vmem:[#allocation3 + $0xd8] sm:$0xff]
    %v529 = vld [vmem:[#allocation3 + $0xe0] sm:$0xff]
    %v530 = vld [vmem:[#allocation3 + $0xe8] sm:$0xff]
    %v531 = vld [vmem:[#allocation3 + $0xf0] sm:$0xff]
    %v532 = vld [vmem:[#allocation3 + $0xf8] sm:$0xff]
    %v533 = vld [vmem:[#allocation4] sm:$0xff]
    %v534 = vld [vmem:[#allocation4 + $0x8] sm:$0xff]
    %v535 = vld [vmem:[#allocation4 + $0x10] sm:$0xff]
    %v536 = vld [vmem:[#allocation4 + $0x18] sm:$0xff]
    %v537 = vld [vmem:[#allocation4 + $0x20] sm:$0xff]
    %v538 = vld [vmem:[#allocation4 + $0x28] sm:$0xff]
    %v539 = vld [vmem:[#allocation4 + $0x30] sm:$0xff]
    %v540 = vld [vmem:[#allocation4 + $0x38] sm:$0xff]
    %v541 = vld [vmem:[#allocation4 + $0x40] sm:$0xff]
    %v542 = vld [vmem:[#allocation4 + $0x48] sm:$0xff]
    %v543 = vld [vmem:[#allocation4 + $0x50] sm:$0xff]
    %v544 = vld [vmem:[#allocation4 + $0x58] sm:$0xff]
    %v545 = vld [vmem:[%s0] sm:$0xf]
    %v546 = vld [vmem:[%s2] ss:$2 sm:$0x3]
    %s547 = scalar_lea.vmem %s2, 1
    %v548 = vld [vmem:[%s547] ss:$2 sm:$0x3]
    %v549 = vld [vmem:[%s4] ss:$2 sm:$0x3]
    %s550 = scalar_lea.vmem %s4, 1
    %v551 = vld [vmem:[%s550] ss:$2 sm:$0x3]
    %v552 = vld [vmem:[%s6] sm:$0x1]
    %553 = vmatprep.subr.bf16.mxu0 %v486
    %554 = vmatpush1.bf16.msra.mxu0 %v485
    %555 = vmatprep.subr.bf16.mxu0 %v488
    %556 = vmatpush1.bf16.msra.mxu0 %v487
    %557 = vmatprep.subr.bf16.mxu0 %v490
    %558 = vmatpush1.bf16.msra.mxu0 %v489
    %559 = vmatprep.subr.bf16.mxu0 %v492
    %560 = vmatpush1.bf16.msra.mxu0 %v491
    %561 = vmatprep.subr.bf16.mxu0 %v494
    %562 = vmatpush1.bf16.msra.mxu0 %v493
    %563 = vmatprep.subr.bf16.mxu0 %v496
    %564 = vmatpush1.bf16.msra.mxu0 %v495
    %565 = vmatprep.subr.bf16.mxu0 %v498
    %566 = vmatpush1.bf16.msra.mxu0 %v497
    %567 = vmatprep.subr.bf16.mxu0 %v500
    %568 = vmatpush1.bf16.msra.mxu0 %v499
    %569 = vmatprep.subr.bf16.mxu0 0
    %570 = vmatpush1.bf16.msra.mxu0 0
    %571 = vmatprep.subr.bf16.mxu0 0
    %572 = vmatpush1.bf16.msra.mxu0 0
    %573 = vmatprep.subr.bf16.mxu0 0
    %574 = vmatpush1.bf16.msra.mxu0 0
    %575 = vmatprep.subr.bf16.mxu0 0
    %576 = vmatpush1.bf16.msra.mxu0 0
    %577 = vmatprep.subr.bf16.mxu0 0
    %578 = vmatpush1.bf16.msra.mxu0 0
    %579 = vmatprep.subr.bf16.mxu0 0
    %580 = vmatpush1.bf16.msra.mxu0 0
    %581 = vmatprep.subr.bf16.mxu0 0
    %582 = vmatpush1.bf16.msra.mxu0 0
    %583 = vmatprep.subr.bf16.mxu0 0
    %584 = vmatpush1.bf16.msra.mxu0 0
    %585 = vmatprep.mubr.bf16.mxu0 0
    %586 = vmatmul.mubr.bf16.gmra.mrb[0].mxu0 %v545
    %v587 = vpop.f32.mrb[0].mxu0
    %v588 = vadd.f32 0.0, %v587
    %v589 = vpop.f32.mrb[0].mxu0
    %v590 = vadd.f32 0.0, %v589
    %v591 = vpop.f32.mrb[0].mxu0
    %v592 = vpop.f32.mrb[0].mxu0
    %593 = vdwg.mxu0
    %v595 = vlaneseq
    %v596 = vshrl.u32 %v595, 7
    %v597 = vsub.s32 0, %v596
    %v598 = vrot.slane %v546, %v597
    %v599 = vlaneseq
    %v600 = vshrl.u32 %v599, 7
    %v601 = vsub.s32 1, %v600
    %v602 = vrot.slane %v546, %v601
    %v605 = vmul.f32 %v588, %v598
    %v606 = vmul.f32 %v590, %v602
    %v608 = vlaneseq
    %v609 = vshrl.u32 %v608, 7
    %v610 = vsub.s32 0, %v609
    %v611 = vrot.slane %v548, %v610
    %v612 = vlaneseq
    %v613 = vshrl.u32 %v612, 7
    %v614 = vsub.s32 1, %v613
    %v615 = vrot.slane %v548, %v614
    %v618 = vadd.f32 %v605, %v611
    %v619 = vadd.f32 %v606, %v615
    %v620 = vmax.f32 %v618, 0.0
    %v621 = vmax.f32 %v619, 0.0
    %v622 = vpack.c.bf16 %v620, %v620
    %v623 = vpack.c.bf16 %v621, %v621
    %624 = vmatprep.subr.bf16.mxu0 %v502
    %625 = vmatpush1.bf16.msra.mxu0 %v501
    %626 = vmatprep.subr.bf16.mxu0 %v504
    %627 = vmatpush1.bf16.msra.mxu0 %v503
    %628 = vmatprep.subr.bf16.mxu0 %v506
    %629 = vmatpush1.bf16.msra.mxu0 %v505
    %630 = vmatprep.subr.bf16.mxu0 %v508
    %631 = vmatpush1.bf16.msra.mxu0 %v507
    %632 = vmatprep.subr.bf16.mxu0 %v510
    %633 = vmatpush1.bf16.msra.mxu0 %v509
    %634 = vmatprep.subr.bf16.mxu0 %v512
    %635 = vmatpush1.bf16.msra.mxu0 %v511
    %636 = vmatprep.subr.bf16.mxu0 %v514
    %637 = vmatpush1.bf16.msra.mxu0 %v513
    %638 = vmatprep.subr.bf16.mxu0 %v516
    %639 = vmatpush1.bf16.msra.mxu0 %v515
    %640 = vmatprep.subr.bf16.mxu0 %v518
    %641 = vmatpush1.bf16.msra.mxu0 %v517
    %642 = vmatprep.subr.bf16.mxu0 %v520
    %643 = vmatpush1.bf16.msra.mxu0 %v519
    %644 = vmatprep.subr.bf16.mxu0 %v522
    %645 = vmatpush1.bf16.msra.mxu0 %v521
    %646 = vmatprep.subr.bf16.mxu0 %v524
    %647 = vmatpush1.bf16.msra.mxu0 %v523
    %648 = vmatprep.subr.bf16.mxu0 %v526
    %649 = vmatpush1.bf16.msra.mxu0 %v525
    %650 = vmatprep.subr.bf16.mxu0 %v528
    %651 = vmatpush1.bf16.msra.mxu0 %v527
    %652 = vmatprep.subr.bf16.mxu0 %v530
    %653 = vmatpush1.bf16.msra.mxu0 %v529
    %654 = vmatprep.subr.bf16.mxu0 %v532
    %655 = vmatpush1.bf16.msra.mxu0 %v531
    %656 = vmatprep.mubr.bf16.mxu0 %v623
    %657 = vmatmul.mubr.bf16.gmra.mrb[0].mxu0 %v622
    %v658 = vpop.f32.mrb[0].mxu0
    %v659 = vadd.f32 0.0, %v658
    %v660 = vpop.f32.mrb[0].mxu0
    %v661 = vadd.f32 0.0, %v660
    %v662 = vpop.f32.mrb[0].mxu0
    %v663 = vpop.f32.mrb[0].mxu0
    %664 = vdwg.mxu0
    %v666 = vlaneseq
    %v667 = vshrl.u32 %v666, 7
    %v668 = vsub.s32 0, %v667
    %v669 = vrot.slane %v549, %v668
    %v670 = vlaneseq
    %v671 = vshrl.u32 %v670, 7
    %v672 = vsub.s32 1, %v671
    %v673 = vrot.slane %v549, %v672
    %v676 = vmul.f32 %v659, %v669
    %v677 = vmul.f32 %v661, %v673
    %v679 = vlaneseq
    %v680 = vshrl.u32 %v679, 7
    %v681 = vsub.s32 0, %v680
    %v682 = vrot.slane %v551, %v681
    %v683 = vlaneseq
    %v684 = vshrl.u32 %v683, 7
    %v685 = vsub.s32 1, %v684
    %v686 = vrot.slane %v551, %v685
    %v689 = vadd.f32 %v676, %v682
    %v690 = vadd.f32 %v677, %v686
    %v691 = vmax.f32 %v689, 0.0
    %v692 = vmax.f32 %v690, 0.0
    %v693 = vpack.c.bf16 %v691, %v691
    %v694 = vpack.c.bf16 %v692, %v692
    %v696 = vlaneseq
    %v697 = vshrl.u32 %v696, 7
    %v698 = vsub.s32 0, %v697
    %v699 = vrot.slane %v552, %v698
    %v702 = vsel %vm45, %v694, 0
    %704 = vmatprep.subr.bf16.mxu0 0
    %705 = vmatpush1.bf16.msra.mxu0 %v533
    %706 = vmatprep.subr.bf16.mxu0 0
    %707 = vmatpush1.bf16.msra.mxu0 %v534
    %708 = vmatprep.subr.bf16.mxu0 0
    %709 = vmatpush1.bf16.msra.mxu0 %v535
    %710 = vmatprep.subr.bf16.mxu0 0
    %711 = vmatpush1.bf16.msra.mxu0 %v536
    %712 = vmatprep.subr.bf16.mxu0 0
    %713 = vmatpush1.bf16.msra.mxu0 %v537
    %714 = vmatprep.subr.bf16.mxu0 0
    %715 = vmatpush1.bf16.msra.mxu0 %v538
    %716 = vmatprep.subr.bf16.mxu0 0
    %717 = vmatpush1.bf16.msra.mxu0 %v539
    %718 = vmatprep.subr.bf16.mxu0 0
    %719 = vmatpush1.bf16.msra.mxu0 %v540
    %720 = vmatprep.subr.bf16.mxu0 0
    %721 = vmatpush1.bf16.msra.mxu0 %v541
    %722 = vmatprep.subr.bf16.mxu0 0
    %723 = vmatpush1.bf16.msra.mxu0 %v542
    %724 = vmatprep.subr.bf16.mxu0 0
    %725 = vmatpush1.bf16.msra.mxu0 %v543
    %726 = vmatprep.subr.bf16.mxu0 0
    %727 = vmatpush1.bf16.msra.mxu0 %v544
    %728 = vmatprep.subr.bf16.mxu0 0
    %729 = vmatpush1.bf16.msra.mxu0 0
    %730 = vmatprep.subr.bf16.mxu0 0
    %731 = vmatpush1.bf16.msra.mxu0 0
    %732 = vmatprep.subr.bf16.mxu0 0
    %733 = vmatpush1.bf16.msra.mxu0 0
    %734 = vmatprep.subr.bf16.mxu0 0
    %735 = vmatpush1.bf16.msra.mxu0 0
    %736 = vmatprep.mubr.bf16.mxu0 %v702
    %737 = vmatmul.mubr.bf16.gmra.mrb[0].mxu0 %v693
    %v738 = vpop.f32.mrb[0].mxu0
    %v739 = vadd.f32 %v699, %v738
    %v740 = vpop.f32.mrb[0].mxu0
    %v741 = vpop.f32.mrb[0].mxu0
    %v742 = vpop.f32.mrb[0].mxu0
    %743 = vdwg.mxu0
    %744 = vst.msk [vmem:[#allocation5] sm:$0xff] %vm45, %v739
    // Predicated region
    $region30: #{cell_forward.1} parent=1 // pred_check
      _
    $region31: #{cell_forward.1} parent=1 // pred_check_branch
      %746 = sbr.rel (0) target = $region33
    $region32: #{cell_forward.1} parent=1 // pred_region
      %s748 = ssub.s32 128, 128
      %749 = vsyncadd [#allocation6], %s748
      %s751 = sshll.u32 [#allocation5], 4
      %s752 = int_to_ptr.vmem [resolvable:$true] %s751
      %754 = dma.vmem_to_hbm [thread:$0]  %s752, 128, %s7, [#allocation6]
    $region33: #{cell_forward.1} parent=1 // pred_fallthru
      _
    // Predicated region
    $region34: #{cell_forward.1} parent=1 // pred_check
      _
    $region35: #{cell_forward.1} parent=1 // pred_check_branch
      %756 = sbr.rel (0) target = $region37
    $region36: #{cell_forward.1} parent=1 // pred_region
      %757 = dma.done [#allocation6], 128
    $region37: #{cell_forward.1} parent=1 // pred_fallthru
      _
    %758 = vsyncpa [#allocation6], 1

</llo_original>
